<compile_context>
chip_gen: v7x
topology: tpu7x:2x2x1
jax: 0.10.0
libtpu: 0.0.40
codegen_flags: <defaults>
</compile_context>

<pallas_src>
import functools

import jax
import jax.numpy as jnp
from jax.experimental import pallas as pl
from jax.experimental.pallas import tpu as pltpu


def _lstm_kernel(x_ref, p_ref, out_ref, *, T, B, H, D):
    """Whole LSTM forward in a single grid-less invocation.

    x_ref   : (T*B, D)        time-major-flattened, batch-padded inputs
    p_ref   : (H+D+1, 4H)     merged params: [W_hh^T ; W_ih^T ; b_ih+b_hh],
                              i/f/o gate columns pre-scaled by 0.5
    out_ref : (B, (T+1)*H)    lane-dense slab: [h_0 | ... | h_{T-1} | c_T]
    """
    x = x_ref[...]                              # (T*B, D)
    params = p_ref[...]                         # (H+D+1, 4H)

    whh = params[0:H, :]                        # (H, 4H)  sublane-aligned slice
    bias = params[H + D:H + D + 1, :]           # (1, 4H)

    # Hoisted input projection for all time steps: two VPU broadcast FMAs
    # instead of a K=2 MXU matmul.
    xproj = bias
    for d in range(D):
        wih_row = params[H + d:H + d + 1, :]    # (1, 4H)
        xproj = xproj + x[:, d:d + 1] * wih_row
    # xproj: (T*B, 4H)

    h = jnp.zeros((B, H), jnp.float32)
    c = jnp.zeros((B, H), jnp.float32)

    outs = []
    # T is small (8): fully unroll with static, sublane-aligned slice offsets.
    for t in range(T):
        gates = (xproj[t * B:(t + 1) * B, :]
                 + jnp.dot(h, whh, preferred_element_type=jnp.float32))

        # Single EUP pass over the fused (B, 4H) gate vector.  Because the
        # i/f/o columns were pre-scaled by 0.5, sigmoid(z) = 0.5*tanh(z/2)+0.5.
        tg = jnp.tanh(gates)                    # (B, 4H)
        i_g = 0.5 * tg[:, 0 * H:1 * H] + 0.5
        f_g = 0.5 * tg[:, 1 * H:2 * H] + 0.5
        g_g = tg[:, 2 * H:3 * H]
        o_g = 0.5 * tg[:, 3 * H:4 * H] + 0.5

        c = f_g * c + i_g * g_g
        h = o_g * jnp.tanh(c)                   # second (and last) EUP push
        outs.append(h)

    outs.append(c)                              # final cell state appended
    # Single lane-dense store of every hidden state plus the final cell state.
    out_ref[...] = jnp.concatenate(outs, axis=1).astype(out_ref.dtype)


def encoder_forward(positions_batch, w_ih, w_hh, b_ih, b_hh):
    """Mirrors Encoder.forward: returns (output, (h_n, c_n)) like nn.LSTM."""
    B, T, D = positions_batch.shape
    H = w_hh.shape[1]
    dtype = positions_batch.dtype

    # Sublane-align the batch (f32 sublane count = 8).
    B_pad = max(8, ((B + 7) // 8) * 8)

    # Time-major flatten of the zero-padded batch: row t*B_pad + b.
    x_pad = jnp.pad(positions_batch.astype(jnp.float32),
                    ((0, B_pad - B), (0, 0), (0, 0)))
    x_flat = jnp.transpose(x_pad, (1, 0, 2)).reshape(T * B_pad, D)

    # Gate pre-scaling for the tanh/sigmoid fold: i, f, o columns x0.5, g x1.
    gate_scale = jnp.concatenate([
        jnp.full((H,), 0.5, jnp.float32),       # i
        jnp.full((H,), 0.5, jnp.float32),       # f
        jnp.ones((H,), jnp.float32),            # g
        jnp.full((H,), 0.5, jnp.float32),       # o
    ])[None, :]                                 # (1, 4H)

    # Merged parameter slab: [W_hh^T ; W_ih^T ; b_ih+b_hh], pre-scaled.
    params = jnp.concatenate([
        w_hh.T.astype(jnp.float32),             # (H, 4H)
        w_ih.T.astype(jnp.float32),             # (D, 4H)
        (b_ih + b_hh).reshape(1, 4 * H).astype(jnp.float32),
    ], axis=0) * gate_scale                     # (H+D+1, 4H)

    kernel = functools.partial(_lstm_kernel, T=T, B=B_pad, H=H, D=D)

    out_slab = pl.pallas_call(
        kernel,
        out_shape=jax.ShapeDtypeStruct((B_pad, (T + 1) * H), jnp.float32),
        in_specs=[
            pl.BlockSpec(memory_space=pltpu.MemorySpace.VMEM),  # x (full)
            pl.BlockSpec(memory_space=pltpu.MemorySpace.VMEM),  # params (full)
        ],
        out_specs=pl.BlockSpec(memory_space=pltpu.MemorySpace.VMEM),
    )(x_flat, params)

    # Slice padded rows off and recover the three LSTM results.
    output = out_slab[:B, :T * H].reshape(B, T, H).astype(dtype)
    h_n = out_slab[:B, (T - 1) * H:T * H].astype(dtype)   # = h_{T-1}
    c_n = out_slab[:B, T * H:(T + 1) * H].astype(dtype)
    return output, (h_n[None, ...], c_n[None, ...])        # (1,B,H) like PyTorch


def _lstm_reference(x, w_ih, w_hh, b_ih, b_hh):
    """Pure-JAX reference (lax.scan) with PyTorch LSTM semantics."""
    B, T, D = x.shape
    H = w_hh.shape[1]
    bias = b_ih + b_hh

    def step(carry, x_t):
        h, c = carry
        gates = x_t @ w_ih.T + h @ w_hh.T + bias
        i = jax.nn.sigmoid(gates[:, 0 * H:1 * H])
        f = jax.nn.sigmoid(gates[:, 1 * H:2 * H])
        g = jnp.tanh(gates[:, 2 * H:3 * H])
        o = jax.nn.sigmoid(gates[:, 3 * H:4 * H])
        c_new = f * c + i * g
        h_new = o * jnp.tanh(c_new)
        return (h_new, c_new), h_new

    init = (jnp.zeros((B, H), x.dtype), jnp.zeros((B, H), x.dtype))
    (h_n, c_n), outs = jax.lax.scan(step, init, jnp.transpose(x, (1, 0, 2)))
    return jnp.transpose(outs, (1, 0, 2)), (h_n[None], c_n[None])


if __name__ == "__main__":
    # Small shapes consistent with the module: batch=2, num_positions=8,
    # input feature = 2 (x, y position), hidden_size=32.
    B, T, D, H = 2, 8, 2, 32

    key = jax.random.PRNGKey(0)
    k_x, k_wih, k_whh, k_bih, k_bhh = jax.random.split(key, 5)

    # Deterministic PyTorch-style init: U(-1/sqrt(H), 1/sqrt(H)).
    bound = 1.0 / jnp.sqrt(jnp.float32(H))
    w_ih = jax.random.uniform(k_wih, (4 * H, D), jnp.float32, -bound, bound)
    w_hh = jax.random.uniform(k_whh, (4 * H, H), jnp.float32, -bound, bound)
    b_ih = jax.random.uniform(k_bih, (4 * H,), jnp.float32, -bound, bound)
    b_hh = jax.random.uniform(k_bhh, (4 * H,), jnp.float32, -bound, bound)

    positions_batch = jax.random.uniform(k_x, (B, T, D), jnp.float32)

    output, (h_n, c_n) = jax.jit(encoder_forward)(
        positions_batch, w_ih, w_hh, b_ih, b_hh)
    jax.block_until_ready((output, h_n, c_n))

    # Correctness check against the pure-JAX reference.
    ref_out, (ref_h, ref_c) = _lstm_reference(
        positions_batch, w_ih, w_hh, b_ih, b_hh)
    assert output.shape == (B, T, H)
    assert h_n.shape == (1, B, H) and c_n.shape == (1, B, H)
    assert jnp.allclose(output, ref_out, atol=2e-3, rtol=2e-3)
    assert jnp.allclose(h_n, ref_h, atol=2e-3, rtol=2e-3)
    assert jnp.allclose(c_n, ref_c, atol=2e-3, rtol=2e-3)

    print("KERNEL_OK")
</pallas_src>

<mosaic_0001>
module attributes {stable_mosaic.version = 11 : i64} {
  func.func @_lstm_kernel(%arg0: memref<64x2xf32, #tpu.memory_space<vmem>>, %arg1: memref<35x128xf32, #tpu.memory_space<vmem>>, %arg2: memref<8x288xf32, #tpu.memory_space<vmem>>) attributes {dimension_semantics = [], scalar_prefetch = 0 : i64, scratch_operands = 0 : i64, tpu.core_type = #tpu.core_type<tc>} {
    %c0 = arith.constant 0 : index
    %c0_0 = arith.constant 0 : index
    %0 = vector.load %arg0[%c0, %c0_0] : memref<64x2xf32, #tpu.memory_space<vmem>>, vector<64x2xf32>
    %c0_1 = arith.constant 0 : index
    %c0_2 = arith.constant 0 : index
    %1 = vector.load %arg1[%c0_1, %c0_2] : memref<35x128xf32, #tpu.memory_space<vmem>>, vector<35x128xf32>
    %2 = vector.extract_strided_slice %1 {offsets = [0, 0], sizes = [32, 128], strides = [1, 1]} : vector<35x128xf32> to vector<32x128xf32>
    %3 = vector.extract_strided_slice %1 {offsets = [34, 0], sizes = [1, 128], strides = [1, 1]} : vector<35x128xf32> to vector<1x128xf32>
    %4 = vector.extract_strided_slice %1 {offsets = [32, 0], sizes = [1, 128], strides = [1, 1]} : vector<35x128xf32> to vector<1x128xf32>
    %5 = vector.extract_strided_slice %0 {offsets = [0, 0], sizes = [64, 1], strides = [1, 1]} : vector<64x2xf32> to vector<64x1xf32>
    %6 = vector.broadcast %5 : vector<64x1xf32> to vector<64x128xf32>
    %7 = vector.broadcast %4 : vector<1x128xf32> to vector<64x128xf32>
    %8 = arith.mulf %6, %7 : vector<64x128xf32>
    %9 = vector.broadcast %3 : vector<1x128xf32> to vector<64x128xf32>
    %10 = arith.addf %9, %8 : vector<64x128xf32>
    %11 = vector.extract_strided_slice %1 {offsets = [33, 0], sizes = [1, 128], strides = [1, 1]} : vector<35x128xf32> to vector<1x128xf32>
    %12 = vector.extract_strided_slice %0 {offsets = [0, 1], sizes = [64, 1], strides = [1, 1]} : vector<64x2xf32> to vector<64x1xf32>
    %13 = vector.broadcast %12 : vector<64x1xf32> to vector<64x128xf32>
    %14 = vector.broadcast %11 : vector<1x128xf32> to vector<64x128xf32>
    %15 = arith.mulf %13, %14 : vector<64x128xf32>
    %16 = arith.addf %10, %15 : vector<64x128xf32>
    %cst = arith.constant 0.000000e+00 : f32
    %17 = vector.broadcast %cst : f32 to vector<8x32xf32>
    %cst_3 = arith.constant 0.000000e+00 : f32
    %18 = vector.broadcast %cst_3 : f32 to vector<8x32xf32>
    %19 = vector.extract_strided_slice %16 {offsets = [0, 0], sizes = [8, 128], strides = [1, 1]} : vector<64x128xf32> to vector<8x128xf32>
    %cst_4 = arith.constant dense<0.000000e+00> : vector<8x128xf32>
    %20 = tpu.matmul %17, %2, %cst_4 {dimension_numbers = #tpu.dot_dimension_numbers<[1], [0], [0], [1], [0, 0, 1, 1], [], []>} : vector<8x32xf32>, vector<32x128xf32>, vector<8x128xf32> -> vector<8x128xf32>
    %21 = arith.addf %19, %20 : vector<8x128xf32>
    %22 = math.tanh %21 : vector<8x128xf32>
    %23 = vector.extract_strided_slice %22 {offsets = [0, 0], sizes = [8, 32], strides = [1, 1]} : vector<8x128xf32> to vector<8x32xf32>
    %cst_5 = arith.constant 5.000000e-01 : f32
    %24 = vector.broadcast %cst_5 : f32 to vector<8x32xf32>
    %25 = arith.mulf %24, %23 : vector<8x32xf32>
    %cst_6 = arith.constant 5.000000e-01 : f32
    %26 = vector.broadcast %cst_6 : f32 to vector<8x32xf32>
    %27 = arith.addf %25, %26 : vector<8x32xf32>
    %28 = vector.extract_strided_slice %22 {offsets = [0, 32], sizes = [8, 32], strides = [1, 1]} : vector<8x128xf32> to vector<8x32xf32>
    %cst_7 = arith.constant 5.000000e-01 : f32
    %29 = vector.broadcast %cst_7 : f32 to vector<8x32xf32>
    %30 = arith.mulf %29, %28 : vector<8x32xf32>
    %cst_8 = arith.constant 5.000000e-01 : f32
    %31 = vector.broadcast %cst_8 : f32 to vector<8x32xf32>
    %32 = arith.addf %30, %31 : vector<8x32xf32>
    %33 = vector.extract_strided_slice %22 {offsets = [0, 64], sizes = [8, 32], strides = [1, 1]} : vector<8x128xf32> to vector<8x32xf32>
    %34 = vector.extract_strided_slice %22 {offsets = [0, 96], sizes = [8, 32], strides = [1, 1]} : vector<8x128xf32> to vector<8x32xf32>
    %cst_9 = arith.constant 5.000000e-01 : f32
    %35 = vector.broadcast %cst_9 : f32 to vector<8x32xf32>
    %36 = arith.mulf %35, %34 : vector<8x32xf32>
    %cst_10 = arith.constant 5.000000e-01 : f32
    %37 = vector.broadcast %cst_10 : f32 to vector<8x32xf32>
    %38 = arith.addf %36, %37 : vector<8x32xf32>
    %39 = arith.mulf %32, %18 : vector<8x32xf32>
    %40 = arith.mulf %27, %33 : vector<8x32xf32>
    %41 = arith.addf %39, %40 : vector<8x32xf32>
    %42 = math.tanh %41 : vector<8x32xf32>
    %43 = arith.mulf %38, %42 : vector<8x32xf32>
    %44 = vector.extract_strided_slice %16 {offsets = [8, 0], sizes = [8, 128], strides = [1, 1]} : vector<64x128xf32> to vector<8x128xf32>
    %cst_11 = arith.constant dense<0.000000e+00> : vector<8x128xf32>
    %45 = tpu.matmul %43, %2, %cst_11 {dimension_numbers = #tpu.dot_dimension_numbers<[1], [0], [0], [1], [0, 0, 1, 1], [], []>} : vector<8x32xf32>, vector<32x128xf32>, vector<8x128xf32> -> vector<8x128xf32>
    %46 = arith.addf %44, %45 : vector<8x128xf32>
    %47 = math.tanh %46 : vector<8x128xf32>
    %48 = vector.extract_strided_slice %47 {offsets = [0, 0], sizes = [8, 32], strides = [1, 1]} : vector<8x128xf32> to vector<8x32xf32>
    %cst_12 = arith.constant 5.000000e-01 : f32
    %49 = vector.broadcast %cst_12 : f32 to vector<8x32xf32>
    %50 = arith.mulf %49, %48 : vector<8x32xf32>
    %cst_13 = arith.constant 5.000000e-01 : f32
    %51 = vector.broadcast %cst_13 : f32 to vector<8x32xf32>
    %52 = arith.addf %50, %51 : vector<8x32xf32>
    %53 = vector.extract_strided_slice %47 {offsets = [0, 32], sizes = [8, 32], strides = [1, 1]} : vector<8x128xf32> to vector<8x32xf32>
    %cst_14 = arith.constant 5.000000e-01 : f32
    %54 = vector.broadcast %cst_14 : f32 to vector<8x32xf32>
    %55 = arith.mulf %54, %53 : vector<8x32xf32>
    %cst_15 = arith.constant 5.000000e-01 : f32
    %56 = vector.broadcast %cst_15 : f32 to vector<8x32xf32>
    %57 = arith.addf %55, %56 : vector<8x32xf32>
    %58 = vector.extract_strided_slice %47 {offsets = [0, 64], sizes = [8, 32], strides = [1, 1]} : vector<8x128xf32> to vector<8x32xf32>
    %59 = vector.extract_strided_slice %47 {offsets = [0, 96], sizes = [8, 32], strides = [1, 1]} : vector<8x128xf32> to vector<8x32xf32>
    %cst_16 = arith.constant 5.000000e-01 : f32
    %60 = vector.broadcast %cst_16 : f32 to vector<8x32xf32>
    %61 = arith.mulf %60, %59 : vector<8x32xf32>
    %cst_17 = arith.constant 5.000000e-01 : f32
    %62 = vector.broadcast %cst_17 : f32 to vector<8x32xf32>
    %63 = arith.addf %61, %62 : vector<8x32xf32>
    %64 = arith.mulf %57, %41 : vector<8x32xf32>
    %65 = arith.mulf %52, %58 : vector<8x32xf32>
    %66 = arith.addf %64, %65 : vector<8x32xf32>
    %67 = math.tanh %66 : vector<8x32xf32>
    %68 = arith.mulf %63, %67 : vector<8x32xf32>
    %69 = vector.extract_strided_slice %16 {offsets = [16, 0], sizes = [8, 128], strides = [1, 1]} : vector<64x128xf32> to vector<8x128xf32>
    %cst_18 = arith.constant dense<0.000000e+00> : vector<8x128xf32>
    %70 = tpu.matmul %68, %2, %cst_18 {dimension_numbers = #tpu.dot_dimension_numbers<[1], [0], [0], [1], [0, 0, 1, 1], [], []>} : vector<8x32xf32>, vector<32x128xf32>, vector<8x128xf32> -> vector<8x128xf32>
    %71 = arith.addf %69, %70 : vector<8x128xf32>
    %72 = math.tanh %71 : vector<8x128xf32>
    %73 = vector.extract_strided_slice %72 {offsets = [0, 0], sizes = [8, 32], strides = [1, 1]} : vector<8x128xf32> to vector<8x32xf32>
    %cst_19 = arith.constant 5.000000e-01 : f32
    %74 = vector.broadcast %cst_19 : f32 to vector<8x32xf32>
    %75 = arith.mulf %74, %73 : vector<8x32xf32>
    %cst_20 = arith.constant 5.000000e-01 : f32
    %76 = vector.broadcast %cst_20 : f32 to vector<8x32xf32>
    %77 = arith.addf %75, %76 : vector<8x32xf32>
    %78 = vector.extract_strided_slice %72 {offsets = [0, 32], sizes = [8, 32], strides = [1, 1]} : vector<8x128xf32> to vector<8x32xf32>
    %cst_21 = arith.constant 5.000000e-01 : f32
    %79 = vector.broadcast %cst_21 : f32 to vector<8x32xf32>
    %80 = arith.mulf %79, %78 : vector<8x32xf32>
    %cst_22 = arith.constant 5.000000e-01 : f32
    %81 = vector.broadcast %cst_22 : f32 to vector<8x32xf32>
    %82 = arith.addf %80, %81 : vector<8x32xf32>
    %83 = vector.extract_strided_slice %72 {offsets = [0, 64], sizes = [8, 32], strides = [1, 1]} : vector<8x128xf32> to vector<8x32xf32>
    %84 = vector.extract_strided_slice %72 {offsets = [0, 96], sizes = [8, 32], strides = [1, 1]} : vector<8x128xf32> to vector<8x32xf32>
    %cst_23 = arith.constant 5.000000e-01 : f32
    %85 = vector.broadcast %cst_23 : f32 to vector<8x32xf32>
    %86 = arith.mulf %85, %84 : vector<8x32xf32>
    %cst_24 = arith.constant 5.000000e-01 : f32
    %87 = vector.broadcast %cst_24 : f32 to vector<8x32xf32>
    %88 = arith.addf %86, %87 : vector<8x32xf32>
    %89 = arith.mulf %82, %66 : vector<8x32xf32>
    %90 = arith.mulf %77, %83 : vector<8x32xf32>
    %91 = arith.addf %89, %90 : vector<8x32xf32>
    %92 = math.tanh %91 : vector<8x32xf32>
    %93 = arith.mulf %88, %92 : vector<8x32xf32>
    %94 = vector.extract_strided_slice %16 {offsets = [24, 0], sizes = [8, 128], strides = [1, 1]} : vector<64x128xf32> to vector<8x128xf32>
    %cst_25 = arith.constant dense<0.000000e+00> : vector<8x128xf32>
    %95 = tpu.matmul %93, %2, %cst_25 {dimension_numbers = #tpu.dot_dimension_numbers<[1], [0], [0], [1], [0, 0, 1, 1], [], []>} : vector<8x32xf32>, vector<32x128xf32>, vector<8x128xf32> -> vector<8x128xf32>
    %96 = arith.addf %94, %95 : vector<8x128xf32>
    %97 = math.tanh %96 : vector<8x128xf32>
    %98 = vector.extract_strided_slice %97 {offsets = [0, 0], sizes = [8, 32], strides = [1, 1]} : vector<8x128xf32> to vector<8x32xf32>
    %cst_26 = arith.constant 5.000000e-01 : f32
    %99 = vector.broadcast %cst_26 : f32 to vector<8x32xf32>
    %100 = arith.mulf %99, %98 : vector<8x32xf32>
    %cst_27 = arith.constant 5.000000e-01 : f32
    %101 = vector.broadcast %cst_27 : f32 to vector<8x32xf32>
    %102 = arith.addf %100, %101 : vector<8x32xf32>
    %103 = vector.extract_strided_slice %97 {offsets = [0, 32], sizes = [8, 32], strides = [1, 1]} : vector<8x128xf32> to vector<8x32xf32>
    %cst_28 = arith.constant 5.000000e-01 : f32
    %104 = vector.broadcast %cst_28 : f32 to vector<8x32xf32>
    %105 = arith.mulf %104, %103 : vector<8x32xf32>
    %cst_29 = arith.constant 5.000000e-01 : f32
    %106 = vector.broadcast %cst_29 : f32 to vector<8x32xf32>
    %107 = arith.addf %105, %106 : vector<8x32xf32>
    %108 = vector.extract_strided_slice %97 {offsets = [0, 64], sizes = [8, 32], strides = [1, 1]} : vector<8x128xf32> to vector<8x32xf32>
    %109 = vector.extract_strided_slice %97 {offsets = [0, 96], sizes = [8, 32], strides = [1, 1]} : vector<8x128xf32> to vector<8x32xf32>
    %cst_30 = arith.constant 5.000000e-01 : f32
    %110 = vector.broadcast %cst_30 : f32 to vector<8x32xf32>
    %111 = arith.mulf %110, %109 : vector<8x32xf32>
    %cst_31 = arith.constant 5.000000e-01 : f32
    %112 = vector.broadcast %cst_31 : f32 to vector<8x32xf32>
    %113 = arith.addf %111, %112 : vector<8x32xf32>
    %114 = arith.mulf %107, %91 : vector<8x32xf32>
    %115 = arith.mulf %102, %108 : vector<8x32xf32>
    %116 = arith.addf %114, %115 : vector<8x32xf32>
    %117 = math.tanh %116 : vector<8x32xf32>
    %118 = arith.mulf %113, %117 : vector<8x32xf32>
    %119 = vector.extract_strided_slice %16 {offsets = [32, 0], sizes = [8, 128], strides = [1, 1]} : vector<64x128xf32> to vector<8x128xf32>
    %cst_32 = arith.constant dense<0.000000e+00> : vector<8x128xf32>
    %120 = tpu.matmul %118, %2, %cst_32 {dimension_numbers = #tpu.dot_dimension_numbers<[1], [0], [0], [1], [0, 0, 1, 1], [], []>} : vector<8x32xf32>, vector<32x128xf32>, vector<8x128xf32> -> vector<8x128xf32>
    %121 = arith.addf %119, %120 : vector<8x128xf32>
    %122 = math.tanh %121 : vector<8x128xf32>
    %123 = vector.extract_strided_slice %122 {offsets = [0, 0], sizes = [8, 32], strides = [1, 1]} : vector<8x128xf32> to vector<8x32xf32>
    %cst_33 = arith.constant 5.000000e-01 : f32
    %124 = vector.broadcast %cst_33 : f32 to vector<8x32xf32>
    %125 = arith.mulf %124, %123 : vector<8x32xf32>
    %cst_34 = arith.constant 5.000000e-01 : f32
    %126 = vector.broadcast %cst_34 : f32 to vector<8x32xf32>
    %127 = arith.addf %125, %126 : vector<8x32xf32>
    %128 = vector.extract_strided_slice %122 {offsets = [0, 32], sizes = [8, 32], strides = [1, 1]} : vector<8x128xf32> to vector<8x32xf32>
    %cst_35 = arith.constant 5.000000e-01 : f32
    %129 = vector.broadcast %cst_35 : f32 to vector<8x32xf32>
    %130 = arith.mulf %129, %128 : vector<8x32xf32>
    %cst_36 = arith.constant 5.000000e-01 : f32
    %131 = vector.broadcast %cst_36 : f32 to vector<8x32xf32>
    %132 = arith.addf %130, %131 : vector<8x32xf32>
    %133 = vector.extract_strided_slice %122 {offsets = [0, 64], sizes = [8, 32], strides = [1, 1]} : vector<8x128xf32> to vector<8x32xf32>
    %134 = vector.extract_strided_slice %122 {offsets = [0, 96], sizes = [8, 32], strides = [1, 1]} : vector<8x128xf32> to vector<8x32xf32>
    %cst_37 = arith.constant 5.000000e-01 : f32
    %135 = vector.broadcast %cst_37 : f32 to vector<8x32xf32>
    %136 = arith.mulf %135, %134 : vector<8x32xf32>
    %cst_38 = arith.constant 5.000000e-01 : f32
    %137 = vector.broadcast %cst_38 : f32 to vector<8x32xf32>
    %138 = arith.addf %136, %137 : vector<8x32xf32>
    %139 = arith.mulf %132, %116 : vector<8x32xf32>
    %140 = arith.mulf %127, %133 : vector<8x32xf32>
    %141 = arith.addf %139, %140 : vector<8x32xf32>
    %142 = math.tanh %141 : vector<8x32xf32>
    %143 = arith.mulf %138, %142 : vector<8x32xf32>
    %144 = vector.extract_strided_slice %16 {offsets = [40, 0], sizes = [8, 128], strides = [1, 1]} : vector<64x128xf32> to vector<8x128xf32>
    %cst_39 = arith.constant dense<0.000000e+00> : vector<8x128xf32>
    %145 = tpu.matmul %143, %2, %cst_39 {dimension_numbers = #tpu.dot_dimension_numbers<[1], [0], [0], [1], [0, 0, 1, 1], [], []>} : vector<8x32xf32>, vector<32x128xf32>, vector<8x128xf32> -> vector<8x128xf32>
    %146 = arith.addf %144, %145 : vector<8x128xf32>
    %147 = math.tanh %146 : vector<8x128xf32>
    %148 = vector.extract_strided_slice %147 {offsets = [0, 0], sizes = [8, 32], strides = [1, 1]} : vector<8x128xf32> to vector<8x32xf32>
    %cst_40 = arith.constant 5.000000e-01 : f32
    %149 = vector.broadcast %cst_40 : f32 to vector<8x32xf32>
    %150 = arith.mulf %149, %148 : vector<8x32xf32>
    %cst_41 = arith.constant 5.000000e-01 : f32
    %151 = vector.broadcast %cst_41 : f32 to vector<8x32xf32>
    %152 = arith.addf %150, %151 : vector<8x32xf32>
    %153 = vector.extract_strided_slice %147 {offsets = [0, 32], sizes = [8, 32], strides = [1, 1]} : vector<8x128xf32> to vector<8x32xf32>
    %cst_42 = arith.constant 5.000000e-01 : f32
    %154 = vector.broadcast %cst_42 : f32 to vector<8x32xf32>
    %155 = arith.mulf %154, %153 : vector<8x32xf32>
    %cst_43 = arith.constant 5.000000e-01 : f32
    %156 = vector.broadcast %cst_43 : f32 to vector<8x32xf32>
    %157 = arith.addf %155, %156 : vector<8x32xf32>
    %158 = vector.extract_strided_slice %147 {offsets = [0, 64], sizes = [8, 32], strides = [1, 1]} : vector<8x128xf32> to vector<8x32xf32>
    %159 = vector.extract_strided_slice %147 {offsets = [0, 96], sizes = [8, 32], strides = [1, 1]} : vector<8x128xf32> to vector<8x32xf32>
    %cst_44 = arith.constant 5.000000e-01 : f32
    %160 = vector.broadcast %cst_44 : f32 to vector<8x32xf32>
    %161 = arith.mulf %160, %159 : vector<8x32xf32>
    %cst_45 = arith.constant 5.000000e-01 : f32
    %162 = vector.broadcast %cst_45 : f32 to vector<8x32xf32>
    %163 = arith.addf %161, %162 : vector<8x32xf32>
    %164 = arith.mulf %157, %141 : vector<8x32xf32>
    %165 = arith.mulf %152, %158 : vector<8x32xf32>
    %166 = arith.addf %164, %165 : vector<8x32xf32>
    %167 = math.tanh %166 : vector<8x32xf32>
    %168 = arith.mulf %163, %167 : vector<8x32xf32>
    %169 = vector.extract_strided_slice %16 {offsets = [48, 0], sizes = [8, 128], strides = [1, 1]} : vector<64x128xf32> to vector<8x128xf32>
    %cst_46 = arith.constant dense<0.000000e+00> : vector<8x128xf32>
    %170 = tpu.matmul %168, %2, %cst_46 {dimension_numbers = #tpu.dot_dimension_numbers<[1], [0], [0], [1], [0, 0, 1, 1], [], []>} : vector<8x32xf32>, vector<32x128xf32>, vector<8x128xf32> -> vector<8x128xf32>
    %171 = arith.addf %169, %170 : vector<8x128xf32>
    %172 = math.tanh %171 : vector<8x128xf32>
    %173 = vector.extract_strided_slice %172 {offsets = [0, 0], sizes = [8, 32], strides = [1, 1]} : vector<8x128xf32> to vector<8x32xf32>
    %cst_47 = arith.constant 5.000000e-01 : f32
    %174 = vector.broadcast %cst_47 : f32 to vector<8x32xf32>
    %175 = arith.mulf %174, %173 : vector<8x32xf32>
    %cst_48 = arith.constant 5.000000e-01 : f32
    %176 = vector.broadcast %cst_48 : f32 to vector<8x32xf32>
    %177 = arith.addf %175, %176 : vector<8x32xf32>
    %178 = vector.extract_strided_slice %172 {offsets = [0, 32], sizes = [8, 32], strides = [1, 1]} : vector<8x128xf32> to vector<8x32xf32>
    %cst_49 = arith.constant 5.000000e-01 : f32
    %179 = vector.broadcast %cst_49 : f32 to vector<8x32xf32>
    %180 = arith.mulf %179, %178 : vector<8x32xf32>
    %cst_50 = arith.constant 5.000000e-01 : f32
    %181 = vector.broadcast %cst_50 : f32 to vector<8x32xf32>
    %182 = arith.addf %180, %181 : vector<8x32xf32>
    %183 = vector.extract_strided_slice %172 {offsets = [0, 64], sizes = [8, 32], strides = [1, 1]} : vector<8x128xf32> to vector<8x32xf32>
    %184 = vector.extract_strided_slice %172 {offsets = [0, 96], sizes = [8, 32], strides = [1, 1]} : vector<8x128xf32> to vector<8x32xf32>
    %cst_51 = arith.constant 5.000000e-01 : f32
    %185 = vector.broadcast %cst_51 : f32 to vector<8x32xf32>
    %186 = arith.mulf %185, %184 : vector<8x32xf32>
    %cst_52 = arith.constant 5.000000e-01 : f32
    %187 = vector.broadcast %cst_52 : f32 to vector<8x32xf32>
    %188 = arith.addf %186, %187 : vector<8x32xf32>
    %189 = arith.mulf %182, %166 : vector<8x32xf32>
    %190 = arith.mulf %177, %183 : vector<8x32xf32>
    %191 = arith.addf %189, %190 : vector<8x32xf32>
    %192 = math.tanh %191 : vector<8x32xf32>
    %193 = arith.mulf %188, %192 : vector<8x32xf32>
    %194 = vector.extract_strided_slice %16 {offsets = [56, 0], sizes = [8, 128], strides = [1, 1]} : vector<64x128xf32> to vector<8x128xf32>
    %cst_53 = arith.constant dense<0.000000e+00> : vector<8x128xf32>
    %195 = tpu.matmul %193, %2, %cst_53 {dimension_numbers = #tpu.dot_dimension_numbers<[1], [0], [0], [1], [0, 0, 1, 1], [], []>} : vector<8x32xf32>, vector<32x128xf32>, vector<8x128xf32> -> vector<8x128xf32>
    %196 = arith.addf %194, %195 : vector<8x128xf32>
    %197 = math.tanh %196 : vector<8x128xf32>
    %198 = vector.extract_strided_slice %197 {offsets = [0, 0], sizes = [8, 32], strides = [1, 1]} : vector<8x128xf32> to vector<8x32xf32>
    %cst_54 = arith.constant 5.000000e-01 : f32
    %199 = vector.broadcast %cst_54 : f32 to vector<8x32xf32>
    %200 = arith.mulf %199, %198 : vector<8x32xf32>
    %cst_55 = arith.constant 5.000000e-01 : f32
    %201 = vector.broadcast %cst_55 : f32 to vector<8x32xf32>
    %202 = arith.addf %200, %201 : vector<8x32xf32>
    %203 = vector.extract_strided_slice %197 {offsets = [0, 32], sizes = [8, 32], strides = [1, 1]} : vector<8x128xf32> to vector<8x32xf32>
    %cst_56 = arith.constant 5.000000e-01 : f32
    %204 = vector.broadcast %cst_56 : f32 to vector<8x32xf32>
    %205 = arith.mulf %204, %203 : vector<8x32xf32>
    %cst_57 = arith.constant 5.000000e-01 : f32
    %206 = vector.broadcast %cst_57 : f32 to vector<8x32xf32>
    %207 = arith.addf %205, %206 : vector<8x32xf32>
    %208 = vector.extract_strided_slice %197 {offsets = [0, 64], sizes = [8, 32], strides = [1, 1]} : vector<8x128xf32> to vector<8x32xf32>
    %209 = vector.extract_strided_slice %197 {offsets = [0, 96], sizes = [8, 32], strides = [1, 1]} : vector<8x128xf32> to vector<8x32xf32>
    %cst_58 = arith.constant 5.000000e-01 : f32
    %210 = vector.broadcast %cst_58 : f32 to vector<8x32xf32>
    %211 = arith.mulf %210, %209 : vector<8x32xf32>
    %cst_59 = arith.constant 5.000000e-01 : f32
    %212 = vector.broadcast %cst_59 : f32 to vector<8x32xf32>
    %213 = arith.addf %211, %212 : vector<8x32xf32>
    %214 = arith.mulf %207, %191 : vector<8x32xf32>
    %215 = arith.mulf %202, %208 : vector<8x32xf32>
    %216 = arith.addf %214, %215 : vector<8x32xf32>
    %217 = math.tanh %216 : vector<8x32xf32>
    %218 = arith.mulf %213, %217 : vector<8x32xf32>
    %219 = tpu.concatenate %43, %68, %93, %118, %143, %168, %193, %218, %216 in 1 : vector<8x32xf32>, vector<8x32xf32>, vector<8x32xf32>, vector<8x32xf32>, vector<8x32xf32>, vector<8x32xf32>, vector<8x32xf32>, vector<8x32xf32>, vector<8x32xf32> -> vector<8x288xf32>
    %c0_60 = arith.constant 0 : index
    %c0_61 = arith.constant 0 : index
    %220 = vector.load %arg2[%c0_60, %c0_61] : memref<8x288xf32, #tpu.memory_space<vmem>>, vector<8x288xf32>
    tpu.vector_store %arg2[%c0_60, %c0_61], %219 {strides = array<i32>} : memref<8x288xf32, #tpu.memory_space<vmem>>, vector<8x288xf32>,
    return
  }
}

</mosaic_0001>

<llo_original>
// kernel: encoder_forward.1
$region0: #{encoder_forward.1}
  #allocation0 [shape = 'u32[]', space=smem, size = 0x4, offset = 0x4, fixed_abs, tag = 'smem constant byte address 0x4 - core index']
  #allocation1 [shape = 'u32[144,128]{1,0:T(1,128)}', space=vmem, size = 0x12000, scoped, tag = 'internal scratch']
  %s0 = inlined_call_operand.vmem [shape: f32[64,2], index: 0, kind: input, shape index: {}]
  %s1 = inlined_call_operand.vmem [shape: f32[35,128], index: 1, kind: input, shape index: {}]
  %s2 = inlined_call_operand.vmem [shape: f32[8,288], index: 2, kind: output, shape index: {}]
  %s3 = sld [smem:[#allocation0]]
  $region18: #{encoder_forward.1} parent=0
    _
  %s5 = ssub.s32 1, %s3
  %s6 = scalar_select 0, %s5, %s3
  // Predicated region
  $region2: #{encoder_forward.1} parent=0 // pred_check
    _
  $region3: #{encoder_forward.1} parent=0 // pred_check_branch
    %8 = sbr.rel (0) target = $region5
  $region4: #{encoder_forward.1} parent=0 // pred_region
    _
  $region5: #{encoder_forward.1} parent=0 // pred_fallthru
    _
  // Predicated region
  $region6: #{encoder_forward.1} parent=0 // pred_check
    _
  $region7: #{encoder_forward.1} parent=0 // pred_check_branch
    %10 = sbr.rel (0) target = $region9
  $region8: #{encoder_forward.1} parent=0 // pred_region
    _
  $region9: #{encoder_forward.1} parent=0 // pred_fallthru
    _
  %v11 = vld [vmem:[%s0] sm:$0xff]
  %v12 = vld [vmem:[%s0 + $0x8] sm:$0xff]
  %v13 = vld [vmem:[%s0 + $0x10] sm:$0xff]
  %v14 = vld [vmem:[%s0 + $0x18] sm:$0xff]
  %v15 = vld [vmem:[%s0 + $0x20] sm:$0xff]
  %v16 = vld [vmem:[%s0 + $0x28] sm:$0xff]
  %v17 = vld [vmem:[%s0 + $0x30] sm:$0xff]
  %v18 = vld [vmem:[%s0 + $0x38] sm:$0xff]
  %v19 = vld [vmem:[%s1] sm:$0xff]
  %v20 = vld [vmem:[%s1 + $0x8] sm:$0xff]
  %v21 = vld [vmem:[%s1 + $0x10] sm:$0xff]
  %v22 = vld [vmem:[%s1 + $0x18] sm:$0xff]
  %v23 = vld [vmem:[%s1 + $0x20] sm:$0x7]
  %25 = vset.pattern.permute.xlu0 0
  %26 = vperm.xlu0 %25, %v11
  %v27 = vpop.permute.xlu0 %26
  %30 = vset.pattern.permute.xlu0 0
  %31 = vperm.xlu0 %30, %v12
  %v32 = vpop.permute.xlu0 %31
  %35 = vset.pattern.permute.xlu0 0
  %36 = vperm.xlu0 %35, %v13
  %v37 = vpop.permute.xlu0 %36
  %40 = vset.pattern.permute.xlu0 0
  %41 = vperm.xlu0 %40, %v14
  %v42 = vpop.permute.xlu0 %41
  %45 = vset.pattern.permute.xlu0 0
  %46 = vperm.xlu0 %45, %v15
  %v47 = vpop.permute.xlu0 %46
  %50 = vset.pattern.permute.xlu0 0
  %51 = vperm.xlu0 %50, %v16
  %v52 = vpop.permute.xlu0 %51
  %55 = vset.pattern.permute.xlu0 0
  %56 = vperm.xlu0 %55, %v17
  %v57 = vpop.permute.xlu0 %56
  %60 = vset.pattern.permute.xlu0 0
  %61 = vperm.xlu0 %60, %v18
  %v62 = vpop.permute.xlu0 %61
  %v64 = vlaneseq
  %v65 = vshrl.u32 %v64, 7
  %v66 = vsub.s32 0, %v65
  %v67 = vrot.slane %v23, %v66
  %v68 = vmul.f32 %v27, %v67
  %v69 = vmul.f32 %v32, %v67
  %v70 = vmul.f32 %v37, %v67
  %v71 = vmul.f32 %v42, %v67
  %v72 = vmul.f32 %v47, %v67
  %v73 = vmul.f32 %v52, %v67
  %v74 = vmul.f32 %v57, %v67
  %v75 = vmul.f32 %v62, %v67
  %v76 = vlaneseq
  %v77 = vshrl.u32 %v76, 7
  %v78 = vsub.s32 2, %v77
  %v79 = vrot.slane %v23, %v78
  %v80 = vadd.f32 %v79, %v68
  %v81 = vadd.f32 %v79, %v69
  %v82 = vadd.f32 %v79, %v70
  %v83 = vadd.f32 %v79, %v71
  %v84 = vadd.f32 %v79, %v72
  %v85 = vadd.f32 %v79, %v73
  %v86 = vadd.f32 %v79, %v74
  %v87 = vadd.f32 %v79, %v75
  %88 = vset.pattern.permute.xlu0 1
  %89 = vperm.xlu0 %88, %v11
  %v90 = vpop.permute.xlu0 %89
  %92 = vset.pattern.permute.xlu0 1
  %93 = vperm.xlu0 %92, %v12
  %v94 = vpop.permute.xlu0 %93
  %96 = vset.pattern.permute.xlu0 1
  %97 = vperm.xlu0 %96, %v13
  %v98 = vpop.permute.xlu0 %97
  %100 = vset.pattern.permute.xlu0 1
  %101 = vperm.xlu0 %100, %v14
  %v102 = vpop.permute.xlu0 %101
  %104 = vset.pattern.permute.xlu0 1
  %105 = vperm.xlu0 %104, %v15
  %v106 = vpop.permute.xlu0 %105
  %108 = vset.pattern.permute.xlu0 1
  %109 = vperm.xlu0 %108, %v16
  %v110 = vpop.permute.xlu0 %109
  %112 = vset.pattern.permute.xlu0 1
  %113 = vperm.xlu0 %112, %v17
  %v114 = vpop.permute.xlu0 %113
  %116 = vset.pattern.permute.xlu0 1
  %117 = vperm.xlu0 %116, %v18
  %v118 = vpop.permute.xlu0 %117
  %v120 = vlaneseq
  %v121 = vshrl.u32 %v120, 7
  %v122 = vsub.s32 1, %v121
  %v123 = vrot.slane %v23, %v122
  %v124 = vmul.f32 %v90, %v123
  %v125 = vmul.f32 %v94, %v123
  %v126 = vmul.f32 %v98, %v123
  %v127 = vmul.f32 %v102, %v123
  %v128 = vmul.f32 %v106, %v123
  %v129 = vmul.f32 %v110, %v123
  %v130 = vmul.f32 %v114, %v123
  %v131 = vmul.f32 %v118, %v123
  %v132 = vadd.f32 %v80, %v124
  %v133 = vadd.f32 %v81, %v125
  %v134 = vadd.f32 %v82, %v126
  %v135 = vadd.f32 %v83, %v127
  %v136 = vadd.f32 %v84, %v128
  %v137 = vadd.f32 %v85, %v129
  %v138 = vadd.f32 %v86, %v130
  %v139 = vadd.f32 %v87, %v131
  %vm140 = vcmask 261120
  %v142 = vsel %vm140, 0.0, 0
  %144 = vmatprep.subr.mxu0 0.0
  %145 = vmatpush1.msra.mxu0 %v19
  %146 = vmatprep.subr.mxu0 0.0
  %147 = vmatpush1.msra.mxu0 %v20
  %148 = vmatprep.subr.mxu0 0.0
  %149 = vmatpush1.msra.mxu0 %v21
  %150 = vmatprep.subr.mxu0 0.0
  %151 = vmatpush1.msra.mxu0 %v22
  %152 = vmatprep.subr.mxu0 0.0
  %153 = vmatpush1.msra.mxu0 0.0
  %154 = vmatprep.subr.mxu0 0.0
  %155 = vmatpush1.msra.mxu0 0.0
  %156 = vmatprep.subr.mxu0 0.0
  %157 = vmatpush1.msra.mxu0 0.0
  %158 = vmatprep.subr.mxu0 0.0
  %159 = vmatpush1.msra.mxu0 0.0
  %160 = vmatprep.subr.mxu0 0.0
  %161 = vmatpush1.msra.mxu0 0.0
  %162 = vmatprep.subr.mxu0 0.0
  %163 = vmatpush1.msra.mxu0 0.0
  %164 = vmatprep.subr.mxu0 0.0
  %165 = vmatpush1.msra.mxu0 0.0
  %166 = vmatprep.subr.mxu0 0.0
  %167 = vmatpush1.msra.mxu0 0.0
  %168 = vmatprep.subr.mxu0 0.0
  %169 = vmatpush1.msra.mxu0 0.0
  %170 = vmatprep.subr.mxu0 0.0
  %171 = vmatpush1.msra.mxu0 0.0
  %172 = vmatprep.subr.mxu0 0.0
  %173 = vmatpush1.msra.mxu0 0.0
  %174 = vmatprep.subr.mxu0 0.0
  %175 = vmatpush1.msra.mxu0 0.0
  %176 = vmatprep.subr.mxu0 0.0
  %177 = vmatpush1.msra.mxu0 0.0
  %178 = vmatprep.subr.mxu0 0.0
  %179 = vmatpush1.msra.mxu0 0.0
  %180 = vmatprep.subr.mxu0 0.0
  %181 = vmatpush1.msra.mxu0 0.0
  %182 = vmatprep.subr.mxu0 0.0
  %183 = vmatpush1.msra.mxu0 0.0
  %184 = vmatprep.subr.mxu0 0.0
  %185 = vmatpush1.msra.mxu0 0.0
  %186 = vmatprep.subr.mxu0 0.0
  %187 = vmatpush1.msra.mxu0 0.0
  %188 = vmatprep.subr.mxu0 0.0
  %189 = vmatpush1.msra.mxu0 0.0
  %190 = vmatprep.subr.mxu0 0.0
  %191 = vmatpush1.msra.mxu0 0.0
  %192 = vmatprep.subr.mxu0 0.0
  %193 = vmatpush1.msra.mxu0 0.0
  %194 = vmatprep.subr.mxu0 0.0
  %195 = vmatpush1.msra.mxu0 0.0
  %196 = vmatprep.subr.mxu0 0.0
  %197 = vmatpush1.msra.mxu0 0.0
  %198 = vmatprep.subr.mxu0 0.0
  %199 = vmatpush1.msra.mxu0 0.0
  %200 = vmatprep.subr.mxu0 0.0
  %201 = vmatpush1.msra.mxu0 0.0
  %202 = vmatprep.subr.mxu0 0.0
  %203 = vmatpush1.msra.mxu0 0.0
  %204 = vmatprep.subr.mxu0 0.0
  %205 = vmatpush1.msra.mxu0 0.0
  %206 = vmatprep.subr.mxu0 0.0
  %207 = vmatpush1.msra.mxu0 0.0
  %208 = vmatprep.mubr.f32.mxu0 0.0
  %209 = vmatmul.mubr.f32.gmra.mrb[0].mxu0 %v142
  %v210 = vpop.f32.mrb[0].mxu0
  %v211 = vadd.f32 0.0, %v210
  %v212 = vpop.f32.mrb[0].mxu0
  %213 = vdwg.mxu0
  %v214 = vadd.f32 %v132, %v211
  %v215 = vtanh.pop %v214
  %v216 = vmul.f32 %v215, 0.5
  %v217 = vadd.f32 %v216, 0.5
  %v218 = vmul.f32 %v217, 0.0
  %220 = vrot.lane.b32.xlu0 %v215, 64
  %v221 = vpop.permute.xlu0 %220
  %v223 = vmul.f32 %v217, %v221
  %225 = vrot.lane.b32.xlu0 %v223, 32
  %v226 = vpop.permute.xlu0 %225
  %v228 = vadd.f32 %v218, %v226
  %v229 = vtanh.pop %v228
  %231 = vrot.lane.b32.xlu0 %v229, 64
  %v232 = vpop.permute.xlu0 %231
  %v234 = vmul.f32 %v217, %v232
  %236 = vrot.lane.b32.xlu0 %v234, 32
  %v237 = vpop.permute.xlu0 %236
  %v238 = vsel %vm140, %v237, 0
  %240 = vmatprep.subr.mxu0 0.0
  %241 = vmatpush1.msra.mxu0 %v19
  %242 = vmatprep.subr.mxu0 0.0
  %243 = vmatpush1.msra.mxu0 %v20
  %244 = vmatprep.subr.mxu0 0.0
  %245 = vmatpush1.msra.mxu0 %v21
  %246 = vmatprep.subr.mxu0 0.0
  %247 = vmatpush1.msra.mxu0 %v22
  %248 = vmatprep.subr.mxu0 0.0
  %249 = vmatpush1.msra.mxu0 0.0
  %250 = vmatprep.subr.mxu0 0.0
  %251 = vmatpush1.msra.mxu0 0.0
  %252 = vmatprep.subr.mxu0 0.0
  %253 = vmatpush1.msra.mxu0 0.0
  %254 = vmatprep.subr.mxu0 0.0
  %255 = vmatpush1.msra.mxu0 0.0
  %256 = vmatprep.subr.mxu0 0.0
  %257 = vmatpush1.msra.mxu0 0.0
  %258 = vmatprep.subr.mxu0 0.0
  %259 = vmatpush1.msra.mxu0 0.0
  %260 = vmatprep.subr.mxu0 0.0
  %261 = vmatpush1.msra.mxu0 0.0
  %262 = vmatprep.subr.mxu0 0.0
  %263 = vmatpush1.msra.mxu0 0.0
  %264 = vmatprep.subr.mxu0 0.0
  %265 = vmatpush1.msra.mxu0 0.0
  %266 = vmatprep.subr.mxu0 0.0
  %267 = vmatpush1.msra.mxu0 0.0
  %268 = vmatprep.subr.mxu0 0.0
  %269 = vmatpush1.msra.mxu0 0.0
  %270 = vmatprep.subr.mxu0 0.0
  %271 = vmatpush1.msra.mxu0 0.0
  %272 = vmatprep.subr.mxu0 0.0
  %273 = vmatpush1.msra.mxu0 0.0
  %274 = vmatprep.subr.mxu0 0.0
  %275 = vmatpush1.msra.mxu0 0.0
  %276 = vmatprep.subr.mxu0 0.0
  %277 = vmatpush1.msra.mxu0 0.0
  %278 = vmatprep.subr.mxu0 0.0
  %279 = vmatpush1.msra.mxu0 0.0
  %280 = vmatprep.subr.mxu0 0.0
  %281 = vmatpush1.msra.mxu0 0.0
  %282 = vmatprep.subr.mxu0 0.0
  %283 = vmatpush1.msra.mxu0 0.0
  %284 = vmatprep.subr.mxu0 0.0
  %285 = vmatpush1.msra.mxu0 0.0
  %286 = vmatprep.subr.mxu0 0.0
  %287 = vmatpush1.msra.mxu0 0.0
  %288 = vmatprep.subr.mxu0 0.0
  %289 = vmatpush1.msra.mxu0 0.0
  %290 = vmatprep.subr.mxu0 0.0
  %291 = vmatpush1.msra.mxu0 0.0
  %292 = vmatprep.subr.mxu0 0.0
  %293 = vmatpush1.msra.mxu0 0.0
  %294 = vmatprep.subr.mxu0 0.0
  %295 = vmatpush1.msra.mxu0 0.0
  %296 = vmatprep.subr.mxu0 0.0
  %297 = vmatpush1.msra.mxu0 0.0
  %298 = vmatprep.subr.mxu0 0.0
  %299 = vmatpush1.msra.mxu0 0.0
  %300 = vmatprep.subr.mxu0 0.0
  %301 = vmatpush1.msra.mxu0 0.0
  %302 = vmatprep.subr.mxu0 0.0
  %303 = vmatpush1.msra.mxu0 0.0
  %304 = vmatprep.mubr.f32.mxu0 0.0
  %305 = vmatmul.mubr.f32.gmra.mrb[0].mxu0 %v238
  %v306 = vpop.f32.mrb[0].mxu0
  %v307 = vadd.f32 0.0, %v306
  %v308 = vpop.f32.mrb[0].mxu0
  %309 = vdwg.mxu0
  %v310 = vadd.f32 %v133, %v307
  %v311 = vtanh.pop %v310
  %v312 = vmul.f32 %v311, 0.5
  %v313 = vadd.f32 %v312, 0.5
  %v314 = vmul.f32 %v313, %v228
  %316 = vrot.lane.b32.xlu0 %v311, 64
  %v317 = vpop.permute.xlu0 %316
  %v319 = vmul.f32 %v313, %v317
  %321 = vrot.lane.b32.xlu0 %v319, 32
  %v322 = vpop.permute.xlu0 %321
  %v324 = vadd.f32 %v314, %v322
  %v325 = vtanh.pop %v324
  %327 = vrot.lane.b32.xlu0 %v325, 64
  %v328 = vpop.permute.xlu0 %327
  %v330 = vmul.f32 %v313, %v328
  %332 = vrot.lane.b32.xlu0 %v330, 32
  %v333 = vpop.permute.xlu0 %332
  %v334 = vsel %vm140, %v333, 0
  %336 = vmatprep.subr.mxu0 0.0
  %337 = vmatpush1.msra.mxu0 %v19
  %338 = vmatprep.subr.mxu0 0.0
  %339 = vmatpush1.msra.mxu0 %v20
  %340 = vmatprep.subr.mxu0 0.0
  %341 = vmatpush1.msra.mxu0 %v21
  %342 = vmatprep.subr.mxu0 0.0
  %343 = vmatpush1.msra.mxu0 %v22
  %344 = vmatprep.subr.mxu0 0.0
  %345 = vmatpush1.msra.mxu0 0.0
  %346 = vmatprep.subr.mxu0 0.0
  %347 = vmatpush1.msra.mxu0 0.0
  %348 = vmatprep.subr.mxu0 0.0
  %349 = vmatpush1.msra.mxu0 0.0
  %350 = vmatprep.subr.mxu0 0.0
  %351 = vmatpush1.msra.mxu0 0.0
  %352 = vmatprep.subr.mxu0 0.0
  %353 = vmatpush1.msra.mxu0 0.0
  %354 = vmatprep.subr.mxu0 0.0
  %355 = vmatpush1.msra.mxu0 0.0
  %356 = vmatprep.subr.mxu0 0.0
  %357 = vmatpush1.msra.mxu0 0.0
  %358 = vmatprep.subr.mxu0 0.0
  %359 = vmatpush1.msra.mxu0 0.0
  %360 = vmatprep.subr.mxu0 0.0
  %361 = vmatpush1.msra.mxu0 0.0
  %362 = vmatprep.subr.mxu0 0.0
  %363 = vmatpush1.msra.mxu0 0.0
  %364 = vmatprep.subr.mxu0 0.0
  %365 = vmatpush1.msra.mxu0 0.0
  %366 = vmatprep.subr.mxu0 0.0
  %367 = vmatpush1.msra.mxu0 0.0
  %368 = vmatprep.subr.mxu0 0.0
  %369 = vmatpush1.msra.mxu0 0.0
  %370 = vmatprep.subr.mxu0 0.0
  %371 = vmatpush1.msra.mxu0 0.0
  %372 = vmatprep.subr.mxu0 0.0
  %373 = vmatpush1.msra.mxu0 0.0
  %374 = vmatprep.subr.mxu0 0.0
  %375 = vmatpush1.msra.mxu0 0.0
  %376 = vmatprep.subr.mxu0 0.0
  %377 = vmatpush1.msra.mxu0 0.0
  %378 = vmatprep.subr.mxu0 0.0
  %379 = vmatpush1.msra.mxu0 0.0
  %380 = vmatprep.subr.mxu0 0.0
  %381 = vmatpush1.msra.mxu0 0.0
  %382 = vmatprep.subr.mxu0 0.0
  %383 = vmatpush1.msra.mxu0 0.0
  %384 = vmatprep.subr.mxu0 0.0
  %385 = vmatpush1.msra.mxu0 0.0
  %386 = vmatprep.subr.mxu0 0.0
  %387 = vmatpush1.msra.mxu0 0.0
  %388 = vmatprep.subr.mxu0 0.0
  %389 = vmatpush1.msra.mxu0 0.0
  %390 = vmatprep.subr.mxu0 0.0
  %391 = vmatpush1.msra.mxu0 0.0
  %392 = vmatprep.subr.mxu0 0.0
  %393 = vmatpush1.msra.mxu0 0.0
  %394 = vmatprep.subr.mxu0 0.0
  %395 = vmatpush1.msra.mxu0 0.0
  %396 = vmatprep.subr.mxu0 0.0
  %397 = vmatpush1.msra.mxu0 0.0
  %398 = vmatprep.subr.mxu0 0.0
  %399 = vmatpush1.msra.mxu0 0.0
  %400 = vmatprep.mubr.f32.mxu0 0.0
  %401 = vmatmul.mubr.f32.gmra.mrb[0].mxu0 %v334
  %v402 = vpop.f32.mrb[0].mxu0
  %v403 = vadd.f32 0.0, %v402
  %v404 = vpop.f32.mrb[0].mxu0
  %405 = vdwg.mxu0
  %v406 = vadd.f32 %v134, %v403
  %v407 = vtanh.pop %v406
  %v408 = vmul.f32 %v407, 0.5
  %v409 = vadd.f32 %v408, 0.5
  %v410 = vmul.f32 %v409, %v324
  %412 = vrot.lane.b32.xlu0 %v407, 64
  %v413 = vpop.permute.xlu0 %412
  %v415 = vmul.f32 %v409, %v413
  %417 = vrot.lane.b32.xlu0 %v415, 32
  %v418 = vpop.permute.xlu0 %417
  %v420 = vadd.f32 %v410, %v418
  %v421 = vtanh.pop %v420
  %423 = vrot.lane.b32.xlu0 %v421, 64
  %v424 = vpop.permute.xlu0 %423
  %v426 = vmul.f32 %v409, %v424
  %428 = vrot.lane.b32.xlu0 %v426, 32
  %v429 = vpop.permute.xlu0 %428
  %v430 = vsel %vm140, %v429, 0
  %432 = vmatprep.subr.mxu0 0.0
  %433 = vmatpush1.msra.mxu0 %v19
  %434 = vmatprep.subr.mxu0 0.0
  %435 = vmatpush1.msra.mxu0 %v20
  %436 = vmatprep.subr.mxu0 0.0
  %437 = vmatpush1.msra.mxu0 %v21
  %438 = vmatprep.subr.mxu0 0.0
  %439 = vmatpush1.msra.mxu0 %v22
  %440 = vmatprep.subr.mxu0 0.0
  %441 = vmatpush1.msra.mxu0 0.0
  %442 = vmatprep.subr.mxu0 0.0
  %443 = vmatpush1.msra.mxu0 0.0
  %444 = vmatprep.subr.mxu0 0.0
  %445 = vmatpush1.msra.mxu0 0.0
  %446 = vmatprep.subr.mxu0 0.0
  %447 = vmatpush1.msra.mxu0 0.0
  %448 = vmatprep.subr.mxu0 0.0
  %449 = vmatpush1.msra.mxu0 0.0
  %450 = vmatprep.subr.mxu0 0.0
  %451 = vmatpush1.msra.mxu0 0.0
  %452 = vmatprep.subr.mxu0 0.0
  %453 = vmatpush1.msra.mxu0 0.0
  %454 = vmatprep.subr.mxu0 0.0
  %455 = vmatpush1.msra.mxu0 0.0
  %456 = vmatprep.subr.mxu0 0.0
  %457 = vmatpush1.msra.mxu0 0.0
  %458 = vmatprep.subr.mxu0 0.0
  %459 = vmatpush1.msra.mxu0 0.0
  %460 = vmatprep.subr.mxu0 0.0
  %461 = vmatpush1.msra.mxu0 0.0
  %462 = vmatprep.subr.mxu0 0.0
  %463 = vmatpush1.msra.mxu0 0.0
  %464 = vmatprep.subr.mxu0 0.0
  %465 = vmatpush1.msra.mxu0 0.0
  %466 = vmatprep.subr.mxu0 0.0
  %467 = vmatpush1.msra.mxu0 0.0
  %468 = vmatprep.subr.mxu0 0.0
  %469 = vmatpush1.msra.mxu0 0.0
  %470 = vmatprep.subr.mxu0 0.0
  %471 = vmatpush1.msra.mxu0 0.0
  %472 = vmatprep.subr.mxu0 0.0
  %473 = vmatpush1.msra.mxu0 0.0
  %474 = vmatprep.subr.mxu0 0.0
  %475 = vmatpush1.msra.mxu0 0.0
  %476 = vmatprep.subr.mxu0 0.0
  %477 = vmatpush1.msra.mxu0 0.0
  %478 = vmatprep.subr.mxu0 0.0
  %479 = vmatpush1.msra.mxu0 0.0
  %480 = vmatprep.subr.mxu0 0.0
  %481 = vmatpush1.msra.mxu0 0.0
  %482 = vmatprep.subr.mxu0 0.0
  %483 = vmatpush1.msra.mxu0 0.0
  %484 = vmatprep.subr.mxu0 0.0
  %485 = vmatpush1.msra.mxu0 0.0
  %486 = vmatprep.subr.mxu0 0.0
  %487 = vmatpush1.msra.mxu0 0.0
  %488 = vmatprep.subr.mxu0 0.0
  %489 = vmatpush1.msra.mxu0 0.0
  %490 = vmatprep.subr.mxu0 0.0
  %491 = vmatpush1.msra.mxu0 0.0
  %492 = vmatprep.subr.mxu0 0.0
  %493 = vmatpush1.msra.mxu0 0.0
  %494 = vmatprep.subr.mxu0 0.0
  %495 = vmatpush1.msra.mxu0 0.0
  %496 = vmatprep.mubr.f32.mxu0 0.0
  %497 = vmatmul.mubr.f32.gmra.mrb[0].mxu0 %v430
  %v498 = vpop.f32.mrb[0].mxu0
  %v499 = vadd.f32 0.0, %v498
  %v500 = vpop.f32.mrb[0].mxu0
  %501 = vdwg.mxu0
  %v502 = vadd.f32 %v135, %v499
  %v503 = vtanh.pop %v502
  %v504 = vmul.f32 %v503, 0.5
  %v505 = vadd.f32 %v504, 0.5
  %v506 = vmul.f32 %v505, %v420
  %508 = vrot.lane.b32.xlu0 %v503, 64
  %v509 = vpop.permute.xlu0 %508
  %v511 = vmul.f32 %v505, %v509
  %513 = vrot.lane.b32.xlu0 %v511, 32
  %v514 = vpop.permute.xlu0 %513
  %v516 = vadd.f32 %v506, %v514
  %v517 = vtanh.pop %v516
  %519 = vrot.lane.b32.xlu0 %v517, 64
  %v520 = vpop.permute.xlu0 %519
  %v522 = vmul.f32 %v505, %v520
  %524 = vrot.lane.b32.xlu0 %v522, 32
  %v525 = vpop.permute.xlu0 %524
  %v526 = vsel %vm140, %v525, 0
  %528 = vmatprep.subr.mxu0 0.0
  %529 = vmatpush1.msra.mxu0 %v19
  %530 = vmatprep.subr.mxu0 0.0
  %531 = vmatpush1.msra.mxu0 %v20
  %532 = vmatprep.subr.mxu0 0.0
  %533 = vmatpush1.msra.mxu0 %v21
  %534 = vmatprep.subr.mxu0 0.0
  %535 = vmatpush1.msra.mxu0 %v22
  %536 = vmatprep.subr.mxu0 0.0
  %537 = vmatpush1.msra.mxu0 0.0
  %538 = vmatprep.subr.mxu0 0.0
  %539 = vmatpush1.msra.mxu0 0.0
  %540 = vmatprep.subr.mxu0 0.0
  %541 = vmatpush1.msra.mxu0 0.0
  %542 = vmatprep.subr.mxu0 0.0
  %543 = vmatpush1.msra.mxu0 0.0
  %544 = vmatprep.subr.mxu0 0.0
  %545 = vmatpush1.msra.mxu0 0.0
  %546 = vmatprep.subr.mxu0 0.0
  %547 = vmatpush1.msra.mxu0 0.0
  %548 = vmatprep.subr.mxu0 0.0
  %549 = vmatpush1.msra.mxu0 0.0
  %550 = vmatprep.subr.mxu0 0.0
  %551 = vmatpush1.msra.mxu0 0.0
  %552 = vmatprep.subr.mxu0 0.0
  %553 = vmatpush1.msra.mxu0 0.0
  %554 = vmatprep.subr.mxu0 0.0
  %555 = vmatpush1.msra.mxu0 0.0
  %556 = vmatprep.subr.mxu0 0.0
  %557 = vmatpush1.msra.mxu0 0.0
  %558 = vmatprep.subr.mxu0 0.0
  %559 = vmatpush1.msra.mxu0 0.0
  %560 = vmatprep.subr.mxu0 0.0
  %561 = vmatpush1.msra.mxu0 0.0
  %562 = vmatprep.subr.mxu0 0.0
  %563 = vmatpush1.msra.mxu0 0.0
  %564 = vmatprep.subr.mxu0 0.0
  %565 = vmatpush1.msra.mxu0 0.0
  %566 = vmatprep.subr.mxu0 0.0
  %567 = vmatpush1.msra.mxu0 0.0
  %568 = vmatprep.subr.mxu0 0.0
  %569 = vmatpush1.msra.mxu0 0.0
  %570 = vmatprep.subr.mxu0 0.0
  %571 = vmatpush1.msra.mxu0 0.0
  %572 = vmatprep.subr.mxu0 0.0
  %573 = vmatpush1.msra.mxu0 0.0
  %574 = vmatprep.subr.mxu0 0.0
  %575 = vmatpush1.msra.mxu0 0.0
  %576 = vmatprep.subr.mxu0 0.0
  %577 = vmatpush1.msra.mxu0 0.0
  %578 = vmatprep.subr.mxu0 0.0
  %579 = vmatpush1.msra.mxu0 0.0
  %580 = vmatprep.subr.mxu0 0.0
  %581 = vmatpush1.msra.mxu0 0.0
  %582 = vmatprep.subr.mxu0 0.0
  %583 = vmatpush1.msra.mxu0 0.0
  %584 = vmatprep.subr.mxu0 0.0
  %585 = vmatpush1.msra.mxu0 0.0
  %586 = vmatprep.subr.mxu0 0.0
  %587 = vmatpush1.msra.mxu0 0.0
  %588 = vmatprep.subr.mxu0 0.0
  %589 = vmatpush1.msra.mxu0 0.0
  %590 = vmatprep.subr.mxu0 0.0
  %591 = vmatpush1.msra.mxu0 0.0
  %592 = vmatprep.mubr.f32.mxu0 0.0
  %593 = vmatmul.mubr.f32.gmra.mrb[0].mxu0 %v526
  %v594 = vpop.f32.mrb[0].mxu0
  %v595 = vadd.f32 0.0, %v594
  %v596 = vpop.f32.mrb[0].mxu0
  %597 = vdwg.mxu0
  %v598 = vadd.f32 %v136, %v595
  %v599 = vtanh.pop %v598
  %v600 = vmul.f32 %v599, 0.5
  %v601 = vadd.f32 %v600, 0.5
  %v602 = vmul.f32 %v601, %v516
  %604 = vrot.lane.b32.xlu0 %v599, 64
  %v605 = vpop.permute.xlu0 %604
  %v607 = vmul.f32 %v601, %v605
  %609 = vrot.lane.b32.xlu0 %v607, 32
  %v610 = vpop.permute.xlu0 %609
  %v612 = vadd.f32 %v602, %v610
  %v613 = vtanh.pop %v612
  %615 = vrot.lane.b32.xlu0 %v613, 64
  %v616 = vpop.permute.xlu0 %615
  %v618 = vmul.f32 %v601, %v616
  %620 = vrot.lane.b32.xlu0 %v618, 32
  %v621 = vpop.permute.xlu0 %620
  %v622 = vsel %vm140, %v621, 0
  %624 = vmatprep.subr.mxu0 0.0
  %625 = vmatpush1.msra.mxu0 %v19
  %626 = vmatprep.subr.mxu0 0.0
  %627 = vmatpush1.msra.mxu0 %v20
  %628 = vmatprep.subr.mxu0 0.0
  %629 = vmatpush1.msra.mxu0 %v21
  %630 = vmatprep.subr.mxu0 0.0
  %631 = vmatpush1.msra.mxu0 %v22
  %632 = vmatprep.subr.mxu0 0.0
  %633 = vmatpush1.msra.mxu0 0.0
  %634 = vmatprep.subr.mxu0 0.0
  %635 = vmatpush1.msra.mxu0 0.0
  %636 = vmatprep.subr.mxu0 0.0
  %637 = vmatpush1.msra.mxu0 0.0
  %638 = vmatprep.subr.mxu0 0.0
  %639 = vmatpush1.msra.mxu0 0.0
  %640 = vmatprep.subr.mxu0 0.0
  %641 = vmatpush1.msra.mxu0 0.0
  %642 = vmatprep.subr.mxu0 0.0
  %643 = vmatpush1.msra.mxu0 0.0
  %644 = vmatprep.subr.mxu0 0.0
  %645 = vmatpush1.msra.mxu0 0.0
  %646 = vmatprep.subr.mxu0 0.0
  %647 = vmatpush1.msra.mxu0 0.0
  %648 = vmatprep.subr.mxu0 0.0
  %649 = vmatpush1.msra.mxu0 0.0
  %650 = vmatprep.subr.mxu0 0.0
  %651 = vmatpush1.msra.mxu0 0.0
  %652 = vmatprep.subr.mxu0 0.0
  %653 = vmatpush1.msra.mxu0 0.0
  %654 = vmatprep.subr.mxu0 0.0
  %655 = vmatpush1.msra.mxu0 0.0
  %656 = vmatprep.subr.mxu0 0.0
  %657 = vmatpush1.msra.mxu0 0.0
  %658 = vmatprep.subr.mxu0 0.0
  %659 = vmatpush1.msra.mxu0 0.0
  %660 = vmatprep.subr.mxu0 0.0
  %661 = vmatpush1.msra.mxu0 0.0
  %662 = vmatprep.subr.mxu0 0.0
  %663 = vmatpush1.msra.mxu0 0.0
  %664 = vmatprep.subr.mxu0 0.0
  %665 = vmatpush1.msra.mxu0 0.0
  %666 = vmatprep.subr.mxu0 0.0
  %667 = vmatpush1.msra.mxu0 0.0
  %668 = vmatprep.subr.mxu0 0.0
  %669 = vmatpush1.msra.mxu0 0.0
  %670 = vmatprep.subr.mxu0 0.0
  %671 = vmatpush1.msra.mxu0 0.0
  %672 = vmatprep.subr.mxu0 0.0
  %673 = vmatpush1.msra.mxu0 0.0
  %674 = vmatprep.subr.mxu0 0.0
  %675 = vmatpush1.msra.mxu0 0.0
  %676 = vmatprep.subr.mxu0 0.0
  %677 = vmatpush1.msra.mxu0 0.0
  %678 = vmatprep.subr.mxu0 0.0
  %679 = vmatpush1.msra.mxu0 0.0
  %680 = vmatprep.subr.mxu0 0.0
  %681 = vmatpush1.msra.mxu0 0.0
  %682 = vmatprep.subr.mxu0 0.0
  %683 = vmatpush1.msra.mxu0 0.0
  %684 = vmatprep.subr.mxu0 0.0
  %685 = vmatpush1.msra.mxu0 0.0
  %686 = vmatprep.subr.mxu0 0.0
  %687 = vmatpush1.msra.mxu0 0.0
  %688 = vmatprep.mubr.f32.mxu0 0.0
  %689 = vmatmul.mubr.f32.gmra.mrb[0].mxu0 %v622
  %v690 = vpop.f32.mrb[0].mxu0
  %v691 = vadd.f32 0.0, %v690
  %v692 = vpop.f32.mrb[0].mxu0
  %693 = vdwg.mxu0
  %v694 = vadd.f32 %v137, %v691
  %v695 = vtanh.pop %v694
  %v696 = vmul.f32 %v695, 0.5
  %v697 = vadd.f32 %v696, 0.5
  %v698 = vmul.f32 %v697, %v612
  %700 = vrot.lane.b32.xlu0 %v695, 64
  %v701 = vpop.permute.xlu0 %700
  %v703 = vmul.f32 %v697, %v701
  %705 = vrot.lane.b32.xlu0 %v703, 32
  %v706 = vpop.permute.xlu0 %705
  %v708 = vadd.f32 %v698, %v706
  %v709 = vtanh.pop %v708
  %711 = vrot.lane.b32.xlu0 %v709, 64
  %v712 = vpop.permute.xlu0 %711
  %v714 = vmul.f32 %v697, %v712
  %716 = vrot.lane.b32.xlu0 %v714, 32
  %v717 = vpop.permute.xlu0 %716
  %v718 = vsel %vm140, %v717, 0
  %720 = vmatprep.subr.mxu0 0.0
  %721 = vmatpush1.msra.mxu0 %v19
  %722 = vmatprep.subr.mxu0 0.0
  %723 = vmatpush1.msra.mxu0 %v20
  %724 = vmatprep.subr.mxu0 0.0
  %725 = vmatpush1.msra.mxu0 %v21
  %726 = vmatprep.subr.mxu0 0.0
  %727 = vmatpush1.msra.mxu0 %v22
  %728 = vmatprep.subr.mxu0 0.0
  %729 = vmatpush1.msra.mxu0 0.0
  %730 = vmatprep.subr.mxu0 0.0
  %731 = vmatpush1.msra.mxu0 0.0
  %732 = vmatprep.subr.mxu0 0.0
  %733 = vmatpush1.msra.mxu0 0.0
  %734 = vmatprep.subr.mxu0 0.0
  %735 = vmatpush1.msra.mxu0 0.0
  %736 = vmatprep.subr.mxu0 0.0
  %737 = vmatpush1.msra.mxu0 0.0
  %738 = vmatprep.subr.mxu0 0.0
  %739 = vmatpush1.msra.mxu0 0.0
  %740 = vmatprep.subr.mxu0 0.0
  %741 = vmatpush1.msra.mxu0 0.0
  %742 = vmatprep.subr.mxu0 0.0
  %743 = vmatpush1.msra.mxu0 0.0
  %744 = vmatprep.subr.mxu0 0.0
  %745 = vmatpush1.msra.mxu0 0.0
  %746 = vmatprep.subr.mxu0 0.0
  %747 = vmatpush1.msra.mxu0 0.0
  %748 = vmatprep.subr.mxu0 0.0
  %749 = vmatpush1.msra.mxu0 0.0
  %750 = vmatprep.subr.mxu0 0.0
  %751 = vmatpush1.msra.mxu0 0.0
  %752 = vmatprep.subr.mxu0 0.0
  %753 = vmatpush1.msra.mxu0 0.0
  %754 = vmatprep.subr.mxu0 0.0
  %755 = vmatpush1.msra.mxu0 0.0
  %756 = vmatprep.subr.mxu0 0.0
  %757 = vmatpush1.msra.mxu0 0.0
  %758 = vmatprep.subr.mxu0 0.0
  %759 = vmatpush1.msra.mxu0 0.0
  %760 = vmatprep.subr.mxu0 0.0
  %761 = vmatpush1.msra.mxu0 0.0
  %762 = vmatprep.subr.mxu0 0.0
  %763 = vmatpush1.msra.mxu0 0.0
  %764 = vmatprep.subr.mxu0 0.0
  %765 = vmatpush1.msra.mxu0 0.0
  %766 = vmatprep.subr.mxu0 0.0
  %767 = vmatpush1.msra.mxu0 0.0
  %768 = vmatprep.subr.mxu0 0.0
  %769 = vmatpush1.msra.mxu0 0.0
  %770 = vmatprep.subr.mxu0 0.0
  %771 = vmatpush1.msra.mxu0 0.0
  %772 = vmatprep.subr.mxu0 0.0
  %773 = vmatpush1.msra.mxu0 0.0
  %774 = vmatprep.subr.mxu0 0.0
  %775 = vmatpush1.msra.mxu0 0.0
  %776 = vmatprep.subr.mxu0 0.0
  %777 = vmatpush1.msra.mxu0 0.0
  %778 = vmatprep.subr.mxu0 0.0
  %779 = vmatpush1.msra.mxu0 0.0
  %780 = vmatprep.subr.mxu0 0.0
  %781 = vmatpush1.msra.mxu0 0.0
  %782 = vmatprep.subr.mxu0 0.0
  %783 = vmatpush1.msra.mxu0 0.0
  %784 = vmatprep.mubr.f32.mxu0 0.0
  %785 = vmatmul.mubr.f32.gmra.mrb[0].mxu0 %v718
  %v786 = vpop.f32.mrb[0].mxu0
  %v787 = vadd.f32 0.0, %v786
  %v788 = vpop.f32.mrb[0].mxu0
  %789 = vdwg.mxu0
  %v790 = vadd.f32 %v138, %v787
  %v791 = vtanh.pop %v790
  %v792 = vmul.f32 %v791, 0.5
  %v793 = vadd.f32 %v792, 0.5
  %v794 = vmul.f32 %v793, %v708
  %796 = vrot.lane.b32.xlu0 %v791, 64
  %v797 = vpop.permute.xlu0 %796
  %v799 = vmul.f32 %v793, %v797
  %801 = vrot.lane.b32.xlu0 %v799, 32
  %v802 = vpop.permute.xlu0 %801
  %v804 = vadd.f32 %v794, %v802
  %v805 = vtanh.pop %v804
  %807 = vrot.lane.b32.xlu0 %v805, 64
  %v808 = vpop.permute.xlu0 %807
  %v810 = vmul.f32 %v793, %v808
  %812 = vrot.lane.b32.xlu0 %v810, 32
  %v813 = vpop.permute.xlu0 %812
  %v814 = vsel %vm140, %v813, 0
  %816 = vmatprep.subr.mxu0 0.0
  %817 = vmatpush1.msra.mxu0 %v19
  %818 = vmatprep.subr.mxu0 0.0
  %819 = vmatpush1.msra.mxu0 %v20
  %820 = vmatprep.subr.mxu0 0.0
  %821 = vmatpush1.msra.mxu0 %v21
  %822 = vmatprep.subr.mxu0 0.0
  %823 = vmatpush1.msra.mxu0 %v22
  %824 = vmatprep.subr.mxu0 0.0
  %825 = vmatpush1.msra.mxu0 0.0
  %826 = vmatprep.subr.mxu0 0.0
  %827 = vmatpush1.msra.mxu0 0.0
  %828 = vmatprep.subr.mxu0 0.0
  %829 = vmatpush1.msra.mxu0 0.0
  %830 = vmatprep.subr.mxu0 0.0
  %831 = vmatpush1.msra.mxu0 0.0
  %832 = vmatprep.subr.mxu0 0.0
  %833 = vmatpush1.msra.mxu0 0.0
  %834 = vmatprep.subr.mxu0 0.0
  %835 = vmatpush1.msra.mxu0 0.0
  %836 = vmatprep.subr.mxu0 0.0
  %837 = vmatpush1.msra.mxu0 0.0
  %838 = vmatprep.subr.mxu0 0.0
  %839 = vmatpush1.msra.mxu0 0.0
  %840 = vmatprep.subr.mxu0 0.0
  %841 = vmatpush1.msra.mxu0 0.0
  %842 = vmatprep.subr.mxu0 0.0
  %843 = vmatpush1.msra.mxu0 0.0
  %844 = vmatprep.subr.mxu0 0.0
  %845 = vmatpush1.msra.mxu0 0.0
  %846 = vmatprep.subr.mxu0 0.0
  %847 = vmatpush1.msra.mxu0 0.0
  %848 = vmatprep.subr.mxu0 0.0
  %849 = vmatpush1.msra.mxu0 0.0
  %850 = vmatprep.subr.mxu0 0.0
  %851 = vmatpush1.msra.mxu0 0.0
  %852 = vmatprep.subr.mxu0 0.0
  %853 = vmatpush1.msra.mxu0 0.0
  %854 = vmatprep.subr.mxu0 0.0
  %855 = vmatpush1.msra.mxu0 0.0
  %856 = vmatprep.subr.mxu0 0.0
  %857 = vmatpush1.msra.mxu0 0.0
  %858 = vmatprep.subr.mxu0 0.0
  %859 = vmatpush1.msra.mxu0 0.0
  %860 = vmatprep.subr.mxu0 0.0
  %861 = vmatpush1.msra.mxu0 0.0
  %862 = vmatprep.subr.mxu0 0.0
  %863 = vmatpush1.msra.mxu0 0.0
  %864 = vmatprep.subr.mxu0 0.0
  %865 = vmatpush1.msra.mxu0 0.0
  %866 = vmatprep.subr.mxu0 0.0
  %867 = vmatpush1.msra.mxu0 0.0
  %868 = vmatprep.subr.mxu0 0.0
  %869 = vmatpush1.msra.mxu0 0.0
  %870 = vmatprep.subr.mxu0 0.0
  %871 = vmatpush1.msra.mxu0 0.0
  %872 = vmatprep.subr.mxu0 0.0
  %873 = vmatpush1.msra.mxu0 0.0
  %874 = vmatprep.subr.mxu0 0.0
  %875 = vmatpush1.msra.mxu0 0.0
  %876 = vmatprep.subr.mxu0 0.0
  %877 = vmatpush1.msra.mxu0 0.0
  %878 = vmatprep.subr.mxu0 0.0
  %879 = vmatpush1.msra.mxu0 0.0
  %880 = vmatprep.mubr.f32.mxu0 0.0
  %881 = vmatmul.mubr.f32.gmra.mrb[0].mxu0 %v814
  %v882 = vpop.f32.mrb[0].mxu0
  %v883 = vadd.f32 0.0, %v882
  %v884 = vpop.f32.mrb[0].mxu0
  %885 = vdwg.mxu0
  %v886 = vadd.f32 %v139, %v883
  %v887 = vtanh.pop %v886
  %v888 = vmul.f32 %v887, 0.5
  %v889 = vadd.f32 %v888, 0.5
  %v890 = vmul.f32 %v889, %v804
  %892 = vrot.lane.b32.xlu0 %v887, 64
  %v893 = vpop.permute.xlu0 %892
  %v895 = vmul.f32 %v889, %v893
  %897 = vrot.lane.b32.xlu0 %v895, 32
  %v898 = vpop.permute.xlu0 %897
  %v900 = vadd.f32 %v890, %v898
  %v901 = vtanh.pop %v900
  %903 = vrot.lane.b32.xlu0 %v901, 64
  %v904 = vpop.permute.xlu0 %903
  %v906 = vmul.f32 %v889, %v904
  %908 = vrot.lane.b32.xlu0 %v330, 64
  %v909 = vpop.permute.xlu0 %908
  %911 = vrot.lane.b32.xlu0 %v426, 96
  %v912 = vpop.permute.xlu0 %911
  %915 = vrot.lane.b32.xlu0 %v714, 64
  %v916 = vpop.permute.xlu0 %915
  %918 = vrot.lane.b32.xlu0 %v810, 96
  %v919 = vpop.permute.xlu0 %918
  %922 = vrot.lane.b32.xlu0 %v900, 96
  %v923 = vpop.permute.xlu0 %922
  %v925 = vsel %vm140, %v237, %v909
  %vm926 = vcmask 523264
  %v927 = vsel %vm926, %v925, %v912
  %vm928 = vcmask 785408
  %v929 = vsel %vm928, %v927, %v522
  %v930 = vsel %vm140, %v621, %v916
  %v931 = vsel %vm926, %v930, %v919
  %v932 = vsel %vm928, %v931, %v906
  %933 = vst [vmem:[%s2] sm:$0xff] %v929
  %934 = vst [vmem:[%s2 + $0x8] sm:$0xff] %v932
  %935 = vst.msk [vmem:[%s2 + $0x10] sm:$0xff] %vm140, %v923
  // Predicated region
  $region10: #{encoder_forward.1} parent=0 // pred_check
    _
  $region11: #{encoder_forward.1} parent=0 // pred_check_branch
    %937 = sbr.rel (0) target = $region13
  $region12: #{encoder_forward.1} parent=0 // pred_region
    _
  $region13: #{encoder_forward.1} parent=0 // pred_fallthru
    _
  // Predicated region
  $region14: #{encoder_forward.1} parent=0 // pred_check
    _
  $region15: #{encoder_forward.1} parent=0 // pred_check_branch
    %939 = sbr.rel (0) target = $region17
  $region16: #{encoder_forward.1} parent=0 // pred_region
    _
  $region17: #{encoder_forward.1} parent=0 // pred_fallthru
    _

</llo_original>
